<compile_context>
chip_gen: v7x
topology: tpu7x:2x2x1
jax: 0.10.0
libtpu: 0.0.40
codegen_flags: <defaults>
</compile_context>

<pallas_src>
import jax
import jax.numpy as jnp
from jax import lax
from jax.experimental import pallas as pl
from jax.experimental.pallas import tpu as pltpu
from typing import NamedTuple


def _round_up(a: int, b: int) -> int:
    return (a + b - 1) // b * b


def _cdiv(a: int, b: int) -> int:
    return (a + b - 1) // b


def _balanced_tile(dim: int, cap: int, align: int) -> int:
    """Largest tile <= cap such that padding stays under one tile."""
    dim_a = _round_up(max(dim, 1), align)
    if dim_a <= cap:
        return dim_a
    n_tiles = _cdiv(dim_a, cap)
    return min(_round_up(_cdiv(dim_a, n_tiles), align), cap)


def _tile_caps():
    """(tm_cap, tn_cap, tk_cap, vmem_limit_bytes), generation-aware."""
    vmem = 64 << 20
    try:
        vmem = int(pltpu.get_tpu_info().vmem_capacity_bytes)
    except Exception:
        pass
    kind = ""
    try:
        kind = jax.devices()[0].device_kind.lower()
    except Exception:
        pass
    if vmem >= (100 << 20):                      # 128 MiB VMEM class
        if "v5e" in kind or "v5 lite" in kind:   # v5e hits roofline ~512 tiles
            return 512, 512, 1024, 96 << 20
        return 1024, 1024, 1024, 96 << 20        # v6e class
    if vmem >= (48 << 20):                       # v7x class (64 MiB VMEM)
        return 512, 768, 1024, 44 << 20
    # Unknown / small-VMEM chip: conservative.
    return 256, 256, 512, max(16 << 20, int(vmem * 0.7))


# ---------------------------------------------------------------------------
# Kernels
# ---------------------------------------------------------------------------
def _labd_kernel_f32out(x_ref, w_ref, b_ref, o_ref):
    # f32 output: accumulate directly into the resident output tile (no scratch).
    k = pl.program_id(2)

    @pl.when(k == 0)
    def _():
        o_ref[...] = jnp.zeros_like(o_ref)

    o_ref[...] += jnp.dot(x_ref[...], w_ref[...],
                          preferred_element_type=jnp.float32)

    @pl.when(k == pl.num_programs(2) - 1)
    def _():
        o_ref[...] = jnp.maximum(o_ref[...] + b_ref[...], 0.0)


def _labd_kernel_acc(x_ref, w_ref, b_ref, o_ref, acc_ref):
    # Narrow output dtype: f32 scratch accumulator, cast once in the finalize.
    k = pl.program_id(2)

    @pl.when(k == 0)
    def _():
        acc_ref[...] = jnp.zeros_like(acc_ref)

    acc_ref[...] += jnp.dot(x_ref[...], w_ref[...],
                            preferred_element_type=jnp.float32)

    @pl.when(k == pl.num_programs(2) - 1)
    def _():
        y = acc_ref[...] + b_ref[...]
        o_ref[...] = jnp.maximum(y, 0.0).astype(o_ref.dtype)


# ---------------------------------------------------------------------------
# Parameter prep (hoisted out of the per-forward path)
# ---------------------------------------------------------------------------
class LABDParams(NamedTuple):
    w_kn: jax.Array   # [Kp, Np] compute dtype, pre-transposed + zero-padded
    b_1n: jax.Array   # [1, Np]  f32, zero-padded
    f_in: int
    f_out: int
    tn: int
    tk: int


def labd_init(weight, bias, *, compute_dtype=jnp.bfloat16) -> LABDParams:
    """weight: [F_out, F_in] (PyTorch layout), bias: [F_out]."""
    F_out, F_in = weight.shape
    _, tn_cap, tk_cap, _ = _tile_caps()
    tn = _balanced_tile(F_out, tn_cap, 128)
    tk = _balanced_tile(F_in, tk_cap, 128)
    Np = _round_up(F_out, tn)
    Kp = _round_up(F_in, tk)
    # One-time cast + transpose to [K, N] + pad to the tile grid.
    w_kn = jnp.pad(weight.astype(compute_dtype).T,
                   ((0, Kp - F_in), (0, Np - F_out)))
    b_1n = jnp.pad(bias.astype(jnp.float32).reshape(1, F_out),
                   ((0, 0), (0, Np - F_out)))
    return LABDParams(w_kn=w_kn, b_1n=b_1n, f_in=F_in, f_out=F_out,
                      tn=tn, tk=tk)


# ---------------------------------------------------------------------------
# Forward
# ---------------------------------------------------------------------------
def labd_forward(x, params: LABDParams, *, force_pallas: bool = False,
                 compute_dtype=jnp.bfloat16):
    """x: [B, F_in] -> relu(x @ W.T + b): [B, F_out]."""
    B, F_in = x.shape
    assert F_in == params.f_in
    F_out = params.f_out
    out_dtype = x.dtype
    w_kn, b_1n = params.w_kn, params.b_1n
    Kp, Np = w_kn.shape
    tn, tk = params.tn, params.tk

    # Tiny problems lose to pallas_call fixed overhead + 128-class padding.
    if not force_pallas and (B * F_in * F_out) < (1 << 18):
        y = jnp.dot(x.astype(compute_dtype), w_kn[:F_in, :F_out],
                    preferred_element_type=jnp.float32)
        return jnp.maximum(y + b_1n[0, :F_out], 0.0).astype(out_dtype)

    tm_cap, _, _, vmem_budget = _tile_caps()
    tm = _balanced_tile(B, tm_cap, 16)          # 16-aligned for bf16 packing
    Bp = _round_up(B, tm)

    xc = x.astype(compute_dtype)
    if (Bp, Kp) != (B, F_in):
        xc = jnp.pad(xc, ((0, Bp - B), (0, Kp - F_in)))

    grid = (Bp // tm, Np // tn, Kp // tk)

    f32_out = out_dtype == jnp.float32
    kernel = _labd_kernel_f32out if f32_out else _labd_kernel_acc
    scratch = [] if f32_out else [pltpu.VMEM((tm, tn), jnp.float32)]

    bytes_accessed = int(
        xc.size * xc.dtype.itemsize * grid[1]        # x re-streamed per N tile
        + w_kn.size * w_kn.dtype.itemsize * grid[0]  # w re-streamed per M tile
        + b_1n.size * 4 * grid[0]
        + Bp * Np * x.dtype.itemsize                 # output written once
    )
    cost = pl.CostEstimate(flops=2 * B * F_in * F_out, transcendentals=0,
                           bytes_accessed=bytes_accessed)

    out = pl.pallas_call(
        kernel,
        out_shape=jax.ShapeDtypeStruct((Bp, Np), out_dtype),
        grid_spec=pltpu.PrefetchScalarGridSpec(
            num_scalar_prefetch=0,
            grid=grid,
            in_specs=[
                pl.BlockSpec((tm, tk), lambda i, j, k: (i, k)),   # x [M, K]
                pl.BlockSpec((tk, tn), lambda i, j, k: (k, j)),   # w [K, N]
                pl.BlockSpec((1, tn), lambda i, j, k: (0, j)),    # bias
            ],
            out_specs=pl.BlockSpec((tm, tn), lambda i, j, k: (i, j)),
            scratch_shapes=scratch,
        ),
        compiler_params=pltpu.CompilerParams(
            dimension_semantics=("parallel", "parallel", "arbitrary"),
            vmem_limit_bytes=vmem_budget,
        ),
        cost_estimate=cost,
    )(xc, w_kn, b_1n)

    if (Bp, Np) != (B, F_out):
        out = out[:B, :F_out]
    return out


# ---------------------------------------------------------------------------
# Self-test
# ---------------------------------------------------------------------------
if __name__ == "__main__":
    # Module defaults: use_bn=False, drop_rate=0.0, use_wn=False, activ='relu'
    # TODO(synk): BatchNorm1d / Dropout / weight_norm branches are inactive
    # under the default constructor args and are not emitted here.
    key = jax.random.PRNGKey(0)
    k1, k2, k3 = jax.random.split(key, 3)

    def init_linear(k, f_in, f_out):
        kw, kb = jax.random.split(k)
        bound = 1.0 / (f_in ** 0.5)
        w = jax.random.uniform(kw, (f_out, f_in), minval=-bound, maxval=bound,
                               dtype=jnp.float32)
        b = jax.random.uniform(kb, (f_out,), minval=-bound, maxval=bound,
                               dtype=jnp.float32)
        return w, b

    def reference(x, w, b):
        # Same bf16 operand rounding as the kernel, f32 accumulation.
        xb = x.astype(jnp.bfloat16).astype(jnp.float32)
        wb = w.astype(jnp.bfloat16).astype(jnp.float32)
        return jnp.maximum(
            jnp.matmul(xb, wb.T, precision=lax.Precision.HIGHEST) + b, 0.0)

    # --- Test 1: small shape, forced through the Pallas kernel (f32 path) ---
    B1, FIN1, FOUT1 = 8, 32, 16
    w1, b1 = init_linear(k1, FIN1, FOUT1)
    x1 = jax.random.normal(jax.random.fold_in(k1, 7), (B1, FIN1),
                           dtype=jnp.float32)
    p1 = labd_init(w1, b1)
    out1 = labd_forward(x1, p1, force_pallas=True)
    jax.block_until_ready(out1)
    ref1 = reference(x1, w1, b1)
    assert out1.shape == (B1, FOUT1)
    assert jnp.allclose(out1, ref1, atol=1e-4, rtol=1e-4), "test1 mismatch"

    # --- Test 2: multi-K-tile grid with M/N/K padding (f32, no scratch) ---
    B2, FIN2, FOUT2 = 200, 1536, 200
    w2, b2 = init_linear(k2, FIN2, FOUT2)
    x2 = jax.random.normal(jax.random.fold_in(k2, 7), (B2, FIN2),
                           dtype=jnp.float32)
    p2 = labd_init(w2, b2)
    out2 = labd_forward(x2, p2)
    jax.block_until_ready(out2)
    ref2 = reference(x2, w2, b2)
    assert out2.shape == (B2, FOUT2)
    assert jnp.allclose(out2, ref2, atol=1e-3, rtol=1e-3), "test2 mismatch"

    # --- Test 3: bf16 output dtype path (f32 scratch accumulator kernel) ---
    B3, FIN3, FOUT3 = 64, 256, 192
    w3, b3 = init_linear(k3, FIN3, FOUT3)
    x3 = jax.random.normal(jax.random.fold_in(k3, 7), (B3, FIN3),
                           dtype=jnp.float32).astype(jnp.bfloat16)
    p3 = labd_init(w3, b3)
    out3 = labd_forward(x3, p3, force_pallas=True)
    jax.block_until_ready(out3)
    ref3 = reference(x3.astype(jnp.float32), w3, b3).astype(jnp.bfloat16)
    assert out3.shape == (B3, FOUT3) and out3.dtype == jnp.bfloat16
    assert jnp.allclose(out3.astype(jnp.float32), ref3.astype(jnp.float32),
                        atol=2e-2, rtol=2e-2), "test3 mismatch"

    print("KERNEL_OK")
</pallas_src>

<mosaic_0001>
module attributes {stable_mosaic.version = 11 : i64} {
  func.func @_labd_kernel_f32out(%arg0: i32, %arg1: i32, %arg2: i32, %arg3: memref<16x128xbf16, #tpu.memory_space<vmem>>, %arg4: memref<128x128xbf16, #tpu.memory_space<vmem>>, %arg5: memref<1x128xf32, #tpu.memory_space<vmem>>, %arg6: memref<16x128xf32, #tpu.memory_space<vmem>>) attributes {dimension_semantics = [#tpu.dimension_semantics<parallel>, #tpu.dimension_semantics<parallel>, #tpu.dimension_semantics<arbitrary>], iteration_bounds = array<i64: 1, 1, 1>, scalar_prefetch = 0 : i64, scratch_operands = 0 : i64, tpu.core_type = #tpu.core_type<tc>, window_params = [{transform_indices = @transform_0, window_bounds = array<i64: 16, 128>}, {transform_indices = @transform_1, window_bounds = array<i64: 128, 128>}, {transform_indices = @transform_2, window_bounds = array<i64: 1, 128>}, {transform_indices = @transform_3, window_bounds = array<i64: 16, 128>}]} {
    %c0_i32 = arith.constant 0 : i32
    %0 = arith.cmpi eq, %arg2, %c0_i32 : i32
    %1 = arith.extui %0 : i1 to i32
    %c0_i32_0 = arith.constant 0 : i32
    %2 = arith.cmpi ne, %1, %c0_i32_0 : i32
    scf.if %2 {
      %cst_10 = arith.constant 0.000000e+00 : f32
      %12 = vector.broadcast %cst_10 : f32 to vector<16x128xf32>
      %c0_11 = arith.constant 0 : index
      %c0_12 = arith.constant 0 : index
      %13 = vector.load %arg6[%c0_11, %c0_12] : memref<16x128xf32, #tpu.memory_space<vmem>>, vector<16x128xf32>
      tpu.vector_store %arg6[%c0_11, %c0_12], %12 {strides = array<i32>} : memref<16x128xf32, #tpu.memory_space<vmem>>, vector<16x128xf32>,
    } else {
    }
    %c0 = arith.constant 0 : index
    %c0_1 = arith.constant 0 : index
    %3 = vector.load %arg6[%c0, %c0_1] : memref<16x128xf32, #tpu.memory_space<vmem>>, vector<16x128xf32>
    %c0_2 = arith.constant 0 : index
    %c0_3 = arith.constant 0 : index
    %4 = vector.load %arg3[%c0_2, %c0_3] : memref<16x128xbf16, #tpu.memory_space<vmem>>, vector<16x128xbf16>
    %c0_4 = arith.constant 0 : index
    %c0_5 = arith.constant 0 : index
    %5 = vector.load %arg4[%c0_4, %c0_5] : memref<128x128xbf16, #tpu.memory_space<vmem>>, vector<128x128xbf16>
    %cst = arith.constant dense<0.000000e+00> : vector<16x128xf32>
    %6 = tpu.matmul %4, %5, %cst {dimension_numbers = #tpu.dot_dimension_numbers<[1], [0], [0], [1], [0, 0, 1, 1], [], []>} : vector<16x128xbf16>, vector<128x128xbf16>, vector<16x128xf32> -> vector<16x128xf32>
    %7 = arith.addf %3, %6 : vector<16x128xf32>
    %c0_6 = arith.constant 0 : index
    %c0_7 = arith.constant 0 : index
    %8 = vector.load %arg6[%c0_6, %c0_7] : memref<16x128xf32, #tpu.memory_space<vmem>>, vector<16x128xf32>
    tpu.vector_store %arg6[%c0_6, %c0_7], %7 {strides = array<i32>} : memref<16x128xf32, #tpu.memory_space<vmem>>, vector<16x128xf32>,
    %c0_i32_8 = arith.constant 0 : i32
    %9 = arith.cmpi eq, %arg2, %c0_i32_8 : i32
    %10 = arith.extui %9 : i1 to i32
    %c0_i32_9 = arith.constant 0 : i32
    %11 = arith.cmpi ne, %10, %c0_i32_9 : i32
    scf.if %11 {
      %c0_10 = arith.constant 0 : index
      %c0_11 = arith.constant 0 : index
      %12 = vector.load %arg6[%c0_10, %c0_11] : memref<16x128xf32, #tpu.memory_space<vmem>>, vector<16x128xf32>
      %c0_12 = arith.constant 0 : index
      %c0_13 = arith.constant 0 : index
      %13 = vector.load %arg5[%c0_12, %c0_13] : memref<1x128xf32, #tpu.memory_space<vmem>>, vector<1x128xf32>
      %14 = vector.broadcast %13 : vector<1x128xf32> to vector<16x128xf32>
      %15 = arith.addf %12, %14 : vector<16x128xf32>
      %cst_14 = arith.constant 0.000000e+00 : f32
      %16 = vector.broadcast %cst_14 : f32 to vector<16x128xf32>
      %17 = arith.maximumf %15, %16 : vector<16x128xf32>
      %c0_15 = arith.constant 0 : index
      %c0_16 = arith.constant 0 : index
      %18 = vector.load %arg6[%c0_15, %c0_16] : memref<16x128xf32, #tpu.memory_space<vmem>>, vector<16x128xf32>
      tpu.vector_store %arg6[%c0_15, %c0_16], %17 {strides = array<i32>} : memref<16x128xf32, #tpu.memory_space<vmem>>, vector<16x128xf32>,
    } else {
    }
    return
  }
  func.func @transform_0(%arg0: i32, %arg1: i32, %arg2: i32) -> (i32, i32) {
    %c0_i32 = arith.constant 0 : i32
    return %arg0, %arg2 : i32, i32
  }
  func.func @transform_1(%arg0: i32, %arg1: i32, %arg2: i32) -> (i32, i32) {
    %c0_i32 = arith.constant 0 : i32
    return %arg2, %arg1 : i32, i32
  }
  func.func @transform_2(%arg0: i32, %arg1: i32, %arg2: i32) -> (i32, i32) {
    %c0_i32 = arith.constant 0 : i32
    %c0_i32_0 = arith.constant 0 : i32
    return %c0_i32, %arg1 : i32, i32
  }
  func.func @transform_3(%arg0: i32, %arg1: i32, %arg2: i32) -> (i32, i32) {
    %c0_i32 = arith.constant 0 : i32
    return %arg0, %arg1 : i32, i32
  }
}

</mosaic_0001>

<llo_original>
// kernel: tpu_custom_call.1
$region0: #{tpu_custom_call.1}
  #allocation0 [shape = 'u32[]', space=smem, size = 0x4, offset = 0x4, fixed_abs, tag = 'smem constant byte address 0x4 - core index']
  #allocation1 [shape = 'u32[144,128]{1,0:T(1,128)}', space=vmem, size = 0x12000, scoped, tag = 'internal scratch']
  %s0 = inlined_call_operand.hbm [shape: bf16[16,128], index: 0, kind: input, shape index: {}]
  %s1 = inlined_call_operand.hbm [shape: bf16[128,128], index: 1, kind: input, shape index: {}]
  %s2 = inlined_call_operand.vmem [shape: f32[1,128], index: 2, kind: input, shape index: {}]
  %s3 = inlined_call_operand.hbm [shape: f32[16,128], index: 3, kind: output, shape index: {}]
  %s4 = sld [smem:[#allocation0]]
  $region38: #{tpu_custom_call.1} parent=0
    _
  %s6 = ssub.s32 1, %s4
  %s7 = scalar_select 0, %s6, %s4
  $region1: #{tpu_custom_call.1} parent=0
    #allocation2 [shape = 'u8[4096]{0}', space=vmem, size = 0x1000, scoped, tag = 'input window, operand 0, single buffered']
    #allocation3 [shape = 's32[1]{0}', space=sflag, size = 0x4, scoped, tag = 'scoped memory for tpu_custom_call.1']
    #allocation4 [shape = 's32[1]{0}', space=sflag, size = 0x4, scoped, tag = 'scoped memory for tpu_custom_call.1']
    #allocation5 [shape = 'u8[32768]{0}', space=vmem, size = 0x8000, scoped, tag = 'input window, operand 1, single buffered']
    #allocation6 [shape = 's32[1]{0}', space=sflag, size = 0x4, scoped, tag = 'scoped memory for tpu_custom_call.1']
    #allocation7 [shape = 'u8[8192]{0}', space=vmem, size = 0x2000, scoped, tag = 'output window, operand 0, single buffered']
    %8 = vsyncpa [#allocation3], 0
    %9 = vsyncpa [#allocation6], 0
    %10 = vsyncpa [#allocation4], 0
    // Predicated region
    $region2: #{tpu_custom_call.1} parent=1 // pred_check
      _
    $region3: #{tpu_custom_call.1} parent=1 // pred_check_branch
      %12 = sbr.rel (0) target = $region5
    $region4: #{tpu_custom_call.1} parent=1 // pred_region
      %s14 = ssub.s32 128, 128
      %15 = vsyncadd [#allocation3], %s14
      %s16 = sshll.u32 [#allocation2], 4
      %s17 = int_to_ptr.vmem [resolvable:$true] %s16
      %22 = dma.hbm_to_vmem [thread:$0]  %s0, 128, %s17, [#allocation3], 64, 64, 4
    $region5: #{tpu_custom_call.1} parent=1 // pred_fallthru
      _
    // Predicated region
    $region6: #{tpu_custom_call.1} parent=1 // pred_check
      _
    $region7: #{tpu_custom_call.1} parent=1 // pred_check_branch
      %24 = sbr.rel (0) target = $region9
    $region8: #{tpu_custom_call.1} parent=1 // pred_region
      %s26 = ssub.s32 1024, 1024
      %27 = vsyncadd [#allocation6], %s26
      %s28 = sshll.u32 [#allocation5], 4
      %s29 = int_to_ptr.vmem [resolvable:$true] %s28
      %34 = dma.hbm_to_vmem [thread:$0]  %s1, 1024, %s29, [#allocation6], 64, 64, 4
    $region9: #{tpu_custom_call.1} parent=1 // pred_fallthru
      _
    // Predicated region
    $region10: #{tpu_custom_call.1} parent=1 // pred_check
      _
    $region11: #{tpu_custom_call.1} parent=1 // pred_check_branch
      %36 = sbr.rel (0) target = $region13
    $region12: #{tpu_custom_call.1} parent=1 // pred_region
      _
    $region13: #{tpu_custom_call.1} parent=1 // pred_fallthru
      _
    // Predicated region
    $region14: #{tpu_custom_call.1} parent=1 // pred_check
      _
    $region15: #{tpu_custom_call.1} parent=1 // pred_check_branch
      %38 = sbr.rel (0) target = $region17
    $region16: #{tpu_custom_call.1} parent=1 // pred_region
      %39 = dma.done [#allocation3], 128
    $region17: #{tpu_custom_call.1} parent=1 // pred_fallthru
      _
    // Predicated region
    $region18: #{tpu_custom_call.1} parent=1 // pred_check
      _
    $region19: #{tpu_custom_call.1} parent=1 // pred_check_branch
      %41 = sbr.rel (0) target = $region21
    $region20: #{tpu_custom_call.1} parent=1 // pred_region
      %42 = dma.done [#allocation6], 1024
    $region21: #{tpu_custom_call.1} parent=1 // pred_fallthru
      _
    %p44 = scmp.eq.s32.totalorder 0, 0
    // Predicated region
    $region22: #{tpu_custom_call.1} parent=1 // pred_check
      %p45 = pneg %p44
    $region23: #{tpu_custom_call.1} parent=1 // pred_check_branch
      %47 = sbr.rel (%p45) target = $region25
    $region24: #{tpu_custom_call.1} parent=1 // pred_region
      %48 = vst [vmem:[#allocation7] sm:$0xff] 0.0
      %49 = vst [vmem:[#allocation7 + $0x8] sm:$0xff] 0.0
    $region25: #{tpu_custom_call.1} parent=1 // pred_fallthru
      _
    %v50 = vld [vmem:[#allocation7] sm:$0xff]
    %v51 = vld [vmem:[#allocation7 + $0x8] sm:$0xff]
    %v52 = vld [vmem:[#allocation2] sm:$0xf]
    %v53 = vld [vmem:[#allocation2 + $0x4] sm:$0xf]
    %v54 = vld [vmem:[#allocation5] sm:$0xf]
    %v55 = vld [vmem:[#allocation5 + $0x4] sm:$0xf]
    %v56 = vld [vmem:[#allocation5 + $0x8] sm:$0xf]
    %v57 = vld [vmem:[#allocation5 + $0xc] sm:$0xf]
    %v58 = vld [vmem:[#allocation5 + $0x10] sm:$0xf]
    %v59 = vld [vmem:[#allocation5 + $0x14] sm:$0xf]
    %v60 = vld [vmem:[#allocation5 + $0x18] sm:$0xf]
    %v61 = vld [vmem:[#allocation5 + $0x1c] sm:$0xf]
    %v62 = vld [vmem:[#allocation5 + $0x20] sm:$0xf]
    %v63 = vld [vmem:[#allocation5 + $0x24] sm:$0xf]
    %v64 = vld [vmem:[#allocation5 + $0x28] sm:$0xf]
    %v65 = vld [vmem:[#allocation5 + $0x2c] sm:$0xf]
    %v66 = vld [vmem:[#allocation5 + $0x30] sm:$0xf]
    %v67 = vld [vmem:[#allocation5 + $0x34] sm:$0xf]
    %v68 = vld [vmem:[#allocation5 + $0x38] sm:$0xf]
    %v69 = vld [vmem:[#allocation5 + $0x3c] sm:$0xf]
    %v72 = vunpack.c.l.b16 %v52
    %v73 = vunpack.c.l.b16 %v53
    %v74 = vpack.c.b16 %v73, %v72
    %v92 = vunpack.c.l.b16 %v54
    %v93 = vunpack.c.l.b16 %v55
    %v94 = vunpack.c.l.b16 %v56
    %v95 = vunpack.c.l.b16 %v57
    %v96 = vunpack.c.l.b16 %v58
    %v97 = vunpack.c.l.b16 %v59
    %v98 = vunpack.c.l.b16 %v60
    %v99 = vunpack.c.l.b16 %v61
    %v100 = vunpack.c.l.b16 %v62
    %v101 = vunpack.c.l.b16 %v63
    %v102 = vunpack.c.l.b16 %v64
    %v103 = vunpack.c.l.b16 %v65
    %v104 = vunpack.c.l.b16 %v66
    %v105 = vunpack.c.l.b16 %v67
    %v106 = vunpack.c.l.b16 %v68
    %v107 = vunpack.c.l.b16 %v69
    %v108 = vpack.c.b16 %v93, %v92
    %v109 = vpack.c.b16 %v95, %v94
    %v110 = vpack.c.b16 %v97, %v96
    %v111 = vpack.c.b16 %v99, %v98
    %v112 = vpack.c.b16 %v101, %v100
    %v113 = vpack.c.b16 %v103, %v102
    %v114 = vpack.c.b16 %v105, %v104
    %v115 = vpack.c.b16 %v107, %v106
    %124 = vmatprep.subr.bf16.mxu0 0
    %125 = vmatpush1.bf16.msra.mxu0 %v108
    %126 = vmatprep.subr.bf16.mxu0 0
    %127 = vmatpush1.bf16.msra.mxu0 %v109
    %128 = vmatprep.subr.bf16.mxu0 0
    %129 = vmatpush1.bf16.msra.mxu0 %v110
    %130 = vmatprep.subr.bf16.mxu0 0
    %131 = vmatpush1.bf16.msra.mxu0 %v111
    %132 = vmatprep.subr.bf16.mxu0 0
    %133 = vmatpush1.bf16.msra.mxu0 %v112
    %134 = vmatprep.subr.bf16.mxu0 0
    %135 = vmatpush1.bf16.msra.mxu0 %v113
    %136 = vmatprep.subr.bf16.mxu0 0
    %137 = vmatpush1.bf16.msra.mxu0 %v114
    %138 = vmatprep.subr.bf16.mxu0 0
    %139 = vmatpush1.bf16.msra.mxu0 %v115
    %140 = vmatprep.subr.bf16.mxu0 0
    %141 = vmatpush1.bf16.msra.mxu0 0
    %142 = vmatprep.subr.bf16.mxu0 0
    %143 = vmatpush1.bf16.msra.mxu0 0
    %144 = vmatprep.subr.bf16.mxu0 0
    %145 = vmatpush1.bf16.msra.mxu0 0
    %146 = vmatprep.subr.bf16.mxu0 0
    %147 = vmatpush1.bf16.msra.mxu0 0
    %148 = vmatprep.subr.bf16.mxu0 0
    %149 = vmatpush1.bf16.msra.mxu0 0
    %150 = vmatprep.subr.bf16.mxu0 0
    %151 = vmatpush1.bf16.msra.mxu0 0
    %152 = vmatprep.subr.bf16.mxu0 0
    %153 = vmatpush1.bf16.msra.mxu0 0
    %154 = vmatprep.subr.bf16.mxu0 0
    %155 = vmatpush1.bf16.msra.mxu0 0
    %156 = vmatprep.mubr.bf16.mxu0 0
    %157 = vmatmul.mubr.bf16.gmra.mrb[0].mxu0 %v74
    %v158 = vpop.f32.mrb[0].mxu0
    %v159 = vadd.f32 0.0, %v158
    %v160 = vpop.f32.mrb[0].mxu0
    %v161 = vpop.f32.mrb[0].mxu0
    %v162 = vadd.f32 0.0, %v161
    %v163 = vpop.f32.mrb[0].mxu0
    %164 = vdwg.mxu0
    %v165 = vadd.f32 %v50, %v159
    %v166 = vadd.f32 %v51, %v162
    %167 = vst [vmem:[#allocation7] sm:$0xff] %v165
    %168 = vst [vmem:[#allocation7 + $0x8] sm:$0xff] %v166
    // Predicated region
    $region26: #{tpu_custom_call.1} parent=1 // pred_check
      %p169 = pneg %p44
    $region27: #{tpu_custom_call.1} parent=1 // pred_check_branch
      %171 = sbr.rel (%p169) target = $region29
    $region28: #{tpu_custom_call.1} parent=1 // pred_region
      %v172 = vld [vmem:[#allocation7] sm:$0xff]
      %v173 = vld [vmem:[#allocation7 + $0x8] sm:$0xff]
      %v174 = vld [vmem:[%s2] sm:$0x1]
      %v176 = vlaneseq
      %v177 = vshrl.u32 %v176, 7
      %v178 = vsub.s32 0, %v177
      %v179 = vrot.slane %v174, %v178
      %v181 = vadd.f32 %v172, %v179
      %v182 = vadd.f32 %v173, %v179
      %v183 = vmax.f32 %v181, 0.0
      %v184 = vmax.f32 %v182, 0.0
      %185 = vst [vmem:[#allocation7] sm:$0xff] %v183
      %186 = vst [vmem:[#allocation7 + $0x8] sm:$0xff] %v184
    $region29: #{tpu_custom_call.1} parent=1 // pred_fallthru
      _
    // Predicated region
    $region30: #{tpu_custom_call.1} parent=1 // pred_check
      _
    $region31: #{tpu_custom_call.1} parent=1 // pred_check_branch
      %188 = sbr.rel (0) target = $region33
    $region32: #{tpu_custom_call.1} parent=1 // pred_region
      %s190 = ssub.s32 256, 256
      %191 = vsyncadd [#allocation4], %s190
      %s192 = sshll.u32 [#allocation7], 4
      %s193 = int_to_ptr.vmem [resolvable:$true] %s192
      %198 = dma.vmem_to_hbm [thread:$0]  %s193, 256, %s3, [#allocation4], 128, 128, 8
    $region33: #{tpu_custom_call.1} parent=1 // pred_fallthru
      _
    // Predicated region
    $region34: #{tpu_custom_call.1} parent=1 // pred_check
      _
    $region35: #{tpu_custom_call.1} parent=1 // pred_check_branch
      %200 = sbr.rel (0) target = $region37
    $region36: #{tpu_custom_call.1} parent=1 // pred_region
      %201 = dma.done [#allocation4], 256
    $region37: #{tpu_custom_call.1} parent=1 // pred_fallthru
      _
    %202 = vsyncpa [#allocation3], 1
    %203 = vsyncpa [#allocation6], 1
    %204 = vsyncpa [#allocation4], 1

</llo_original>
